<compile_context>
chip_gen: v7x
topology: tpu7x:2x2x1
jax: 0.10.0
libtpu: 0.0.40
codegen_flags: <defaults>
</compile_context>

<pallas_src>
import functools

import jax
import jax.numpy as jnp
from jax.experimental import pallas as pl
from jax.experimental.pallas import tpu as pltpu


def _static_pow(u, gamma):
    """(1-p)**gamma. Integer gamma -> VPU multiply chain; else fall back to pow."""
    g = float(gamma)
    if g == 0.0:
        return jnp.ones_like(u)
    if g == round(g) and 0.0 < g <= 16.0:
        k = int(round(g))
        result = None
        base = u
        while k:  # exponentiation by squaring, trace-time unrolled
            if k & 1:
                result = base if result is None else result * base
            k >>= 1
            if k:
                base = base * base
        return result
    return jnp.power(u, g)  # non-integer gamma: exp/log pair on the EUP


def _focal_loss_kernel(x_ref, t_ref, a_ref, out_ref, *, gamma):
    # x_ref:   (C, TILE_N) logits (any float dtype), classes on sublanes, batch on lanes
    # t_ref:   (1, TILE_N) int32 target class ids
    # a_ref:   (C, 1) float32 per-class alpha
    # out_ref: (1, TILE_N) float32 per-row focal loss
    x = x_ref[...].astype(jnp.float32)                      # (C, T)
    t = t_ref[...]                                          # (1, T)
    a = a_ref[...]                                          # (C, 1)

    c, tn = x.shape

    # Numerically stable log-softmax pieces (full softmax never materialized).
    m = jnp.max(x, axis=0, keepdims=True)                   # (1, T)
    s = jnp.sum(jnp.exp(x - m), axis=0, keepdims=True)      # (1, T)

    # One-hot of the target class via sublane iota (replaces torch scatter_).
    cls = jax.lax.broadcasted_iota(jnp.int32, (c, tn), 0)   # (C, T)
    mask = (cls == t).astype(jnp.float32)                   # (C, T)

    x_t = jnp.sum(x * mask, axis=0, keepdims=True)          # logit of target class (1, T)
    alpha_t = jnp.sum(a * mask, axis=0, keepdims=True)      # alpha[target]          (1, T)

    log_p = (x_t - m) - jnp.log(s)                          # log softmax(x)[target]
    probs = jnp.exp(log_p)                                  # softmax(x)[target]
    u = jnp.maximum(1.0 - probs, 0.0)                       # clamp: no NaN from rounding

    out_ref[...] = -alpha_t * _static_pow(u, gamma) * log_p


def _pick_tile_n(n, c, itemsize):
    """Batch-tile size: lane-aligned, logits block <= ~1 MiB so 2x double-buffered
    input streams stay far below scoped VMEM on v5e/v6e/v7x."""
    if n <= 128:
        return n
    t = (1 << 20) // max(c * itemsize, 1)
    t = max(128, min(2048, (t // 128) * 128))
    return min(t, (n // 128) * 128)


def focal_loss(inputs, targets, alpha, *, gamma=2.0, size_average=True, tile_n=None):
    """Pallas implementation of FocalLoss.forward.

    inputs:  (N, C) float logits (f32 or bf16; NOT up-cast in the wrapper)
    targets: (N,)   integer class ids
    alpha:   (C,)   float per-class alpha (PyTorch module stores (C, 1); flattened)
    Returns a scalar float32 loss.
    """
    n, c = inputs.shape
    x = jnp.transpose(inputs)                         # (C, N): batch on the lane axis
    t = targets.astype(jnp.int32).reshape(1, n)       # lane-dense targets
    a = alpha.astype(jnp.float32).reshape(c, 1)

    if tile_n is None:
        tile_n = _pick_tile_n(n, c, x.dtype.itemsize)
    tile_n = int(min(tile_n, n))
    if tile_n < n:
        tile_n = max(128, (tile_n // 128) * 128)      # lane-aligned interior tiles

    grid = (pl.cdiv(n, tile_n),)
    kernel = functools.partial(_focal_loss_kernel, gamma=float(gamma))

    per_row = pl.pallas_call(
        kernel,
        out_shape=jax.ShapeDtypeStruct((1, n), jnp.float32),
        grid=grid,
        in_specs=[
            pl.BlockSpec((c, tile_n), lambda i: (0, i)),   # logits (transposed)
            pl.BlockSpec((1, tile_n), lambda i: (0, i)),   # targets
            pl.BlockSpec((c, 1), lambda i: (0, 0)),        # alpha (same block every tile)
        ],
        out_specs=pl.BlockSpec((1, tile_n), lambda i: (0, i)),
        compiler_params=pltpu.CompilerParams(
            dimension_semantics=("parallel",),             # tiles independent -> megacore
            vmem_limit_bytes=32 * 1024 * 1024,
        ),
    )(x, t, a)

    per_row = per_row.reshape(n)
    # Tiny final reduction over N scalars stays outside the kernel (keeps the grid axis
    # parallel / sharded across TensorCores on v7x).
    return jnp.mean(per_row) if size_average else jnp.sum(per_row)


def focal_loss_ref(inputs, targets, alpha, *, gamma=2.0, size_average=True):
    """Pure-JAX reference mirroring the PyTorch forward exactly."""
    n, c = inputs.shape
    p = jax.nn.softmax(inputs.astype(jnp.float32), axis=1)
    class_mask = jax.nn.one_hot(targets, c, dtype=jnp.float32)
    probs = jnp.sum(p * class_mask, axis=1, keepdims=True)
    alpha_t = alpha.astype(jnp.float32)[targets].reshape(-1, 1)
    log_p = jnp.log(probs)
    batch_loss = -alpha_t * jnp.power(1.0 - probs, gamma) * log_p
    return jnp.mean(batch_loss) if size_average else jnp.sum(batch_loss)


if __name__ == "__main__":
    key = jax.random.PRNGKey(0)
    k1, k2, k3, k4 = jax.random.split(key, 4)

    # Primary check: N=256 observations, C=16 classes, multi-tile grid (tile_n=128).
    N, C = 256, 16
    inputs = jax.random.normal(k1, (N, C), dtype=jnp.float32)
    targets = jax.random.randint(k2, (N,), 0, C, dtype=jnp.int32)
    alpha = jnp.full((C,), 0.25, dtype=jnp.float32)  # __init__ default: 0.25 per class

    loss = jax.block_until_ready(
        focal_loss(inputs, targets, alpha, gamma=2.0, size_average=True, tile_n=128)
    )
    ref = jax.block_until_ready(
        focal_loss_ref(inputs, targets, alpha, gamma=2.0, size_average=True)
    )
    assert jnp.allclose(loss, ref, rtol=1e-5, atol=1e-6), (loss, ref)

    # Secondary check: ragged N (partial last tile), sum reduction, C=7 classes.
    N2, C2 = 200, 7
    inputs2 = jax.random.normal(k3, (N2, C2), dtype=jnp.float32)
    targets2 = jax.random.randint(k4, (N2,), 0, C2, dtype=jnp.int32)
    alpha2 = jnp.full((C2,), 0.25, dtype=jnp.float32)

    loss2 = jax.block_until_ready(
        focal_loss(inputs2, targets2, alpha2, gamma=2.0, size_average=False, tile_n=128)
    )
    ref2 = jax.block_until_ready(
        focal_loss_ref(inputs2, targets2, alpha2, gamma=2.0, size_average=False)
    )
    assert jnp.allclose(loss2, ref2, rtol=1e-5, atol=1e-5), (loss2, ref2)

    print("KERNEL_OK")
</pallas_src>

<mosaic_0001>
module attributes {stable_mosaic.version = 11 : i64} {
  func.func @_focal_loss_kernel(%arg0: i32, %arg1: memref<16x128xf32, #tpu.memory_space<vmem>>, %arg2: memref<1x128xi32, #tpu.memory_space<vmem>>, %arg3: memref<16x1xf32, #tpu.memory_space<vmem>>, %arg4: memref<1x128xf32, #tpu.memory_space<vmem>>) attributes {dimension_semantics = [#tpu.dimension_semantics<parallel>], iteration_bounds = array<i64: 2>, scalar_prefetch = 0 : i64, scratch_operands = 0 : i64, tpu.core_type = #tpu.core_type<tc>, window_params = [{transform_indices = @transform_0, window_bounds = array<i64: 16, 128>}, {transform_indices = @transform_1, window_bounds = array<i64: 1, 128>}, {pipeline_mode = #tpu.pipeline_mode<synchronous>, transform_indices = @transform_2, window_bounds = array<i64: 16, 1>}, {transform_indices = @transform_3, window_bounds = array<i64: 1, 128>}]} {
    %c0 = arith.constant 0 : index
    %c0_0 = arith.constant 0 : index
    %0 = vector.load %arg1[%c0, %c0_0] : memref<16x128xf32, #tpu.memory_space<vmem>>, vector<16x128xf32>
    %c0_1 = arith.constant 0 : index
    %c0_2 = arith.constant 0 : index
    %1 = vector.load %arg2[%c0_1, %c0_2] : memref<1x128xi32, #tpu.memory_space<vmem>>, vector<1x128xi32>
    %c0_3 = arith.constant 0 : index
    %c0_4 = arith.constant 0 : index
    %2 = vector.load %arg3[%c0_3, %c0_4] : memref<16x1xf32, #tpu.memory_space<vmem>>, vector<16x1xf32>
    %cst = arith.constant dense<0xFF800000> : vector<128xf32>
    %3 = vector.multi_reduction <maximumf>, %0, %cst [0] : vector<16x128xf32> to vector<128xf32>
    %4 = vector.shape_cast %3 : vector<128xf32> to vector<1x128xf32>
    %5 = vector.broadcast %4 : vector<1x128xf32> to vector<16x128xf32>
    %6 = arith.subf %0, %5 : vector<16x128xf32>
    %7 = math.exp %6 : vector<16x128xf32>
    %cst_5 = arith.constant dense<0.000000e+00> : vector<128xf32>
    %8 = vector.multi_reduction <add>, %7, %cst_5 [0] : vector<16x128xf32> to vector<128xf32>
    %9 = vector.shape_cast %8 : vector<128xf32> to vector<1x128xf32>
    %10 = tpu.iota {dimensions = array<i32: 0>} : vector<16x128xi32>
    %11 = vector.broadcast %1 : vector<1x128xi32> to vector<16x128xi32>
    %12 = arith.cmpi eq, %10, %11 : vector<16x128xi32>
    %13 = arith.extui %12 : vector<16x128xi1> to vector<16x128xi32>
    %14 = arith.sitofp %13 : vector<16x128xi32> to vector<16x128xf32>
    %15 = arith.mulf %0, %14 : vector<16x128xf32>
    %cst_6 = arith.constant dense<0.000000e+00> : vector<128xf32>
    %16 = vector.multi_reduction <add>, %15, %cst_6 [0] : vector<16x128xf32> to vector<128xf32>
    %17 = vector.shape_cast %16 : vector<128xf32> to vector<1x128xf32>
    %18 = vector.broadcast %2 : vector<16x1xf32> to vector<16x128xf32>
    %19 = arith.mulf %18, %14 : vector<16x128xf32>
    %cst_7 = arith.constant dense<0.000000e+00> : vector<128xf32>
    %20 = vector.multi_reduction <add>, %19, %cst_7 [0] : vector<16x128xf32> to vector<128xf32>
    %21 = vector.shape_cast %20 : vector<128xf32> to vector<1x128xf32>
    %22 = arith.subf %17, %4 : vector<1x128xf32>
    %23 = math.log %9 : vector<1x128xf32>
    %24 = arith.subf %22, %23 : vector<1x128xf32>
    %25 = math.exp %24 : vector<1x128xf32>
    %cst_8 = arith.constant 1.000000e+00 : f32
    %26 = vector.broadcast %cst_8 : f32 to vector<1x128xf32>
    %27 = arith.subf %26, %25 : vector<1x128xf32>
    %cst_9 = arith.constant 0.000000e+00 : f32
    %28 = vector.broadcast %cst_9 : f32 to vector<1x128xf32>
    %29 = arith.maximumf %27, %28 : vector<1x128xf32>
    %cst_10 = arith.constant 0.000000e+00 : f32
    %30 = vector.broadcast %cst_10 : f32 to vector<1x128xf32>
    %31 = arith.subf %30, %21 : vector<1x128xf32>
    %32 = arith.mulf %29, %29 : vector<1x128xf32>
    %33 = arith.mulf %31, %32 : vector<1x128xf32>
    %34 = arith.mulf %33, %24 : vector<1x128xf32>
    %c0_11 = arith.constant 0 : index
    %c0_12 = arith.constant 0 : index
    %35 = vector.load %arg4[%c0_11, %c0_12] : memref<1x128xf32, #tpu.memory_space<vmem>>, vector<1x128xf32>
    tpu.vector_store %arg4[%c0_11, %c0_12], %34 {strides = array<i32>} : memref<1x128xf32, #tpu.memory_space<vmem>>, vector<1x128xf32>,
    return
  }
  func.func @transform_0(%arg0: i32) -> (i32, i32) {
    %c0_i32 = arith.constant 0 : i32
    %c0_i32_0 = arith.constant 0 : i32
    return %c0_i32, %arg0 : i32, i32
  }
  func.func @transform_1(%arg0: i32) -> (i32, i32) {
    %c0_i32 = arith.constant 0 : i32
    %c0_i32_0 = arith.constant 0 : i32
    return %c0_i32, %arg0 : i32, i32
  }
  func.func @transform_2(%arg0: i32) -> (i32, i32) {
    %c0_i32 = arith.constant 0 : i32
    %c0_i32_0 = arith.constant 0 : i32
    %c0_i32_1 = arith.constant 0 : i32
    return %c0_i32, %c0_i32_0 : i32, i32
  }
  func.func @transform_3(%arg0: i32) -> (i32, i32) {
    %c0_i32 = arith.constant 0 : i32
    %c0_i32_0 = arith.constant 0 : i32
    return %c0_i32, %arg0 : i32, i32
  }
}

</mosaic_0001>

<llo_original>
// kernel: tpu_custom_call.1
$region0: #{tpu_custom_call.1}
  #allocation0 [shape = 'u32[]', space=smem, size = 0x4, offset = 0x4, fixed_abs, tag = 'smem constant byte address 0x4 - core index']
  #allocation1 [shape = 'u32[144,128]{1,0:T(1,128)}', space=vmem, size = 0x12000, scoped, tag = 'internal scratch']
  %s0 = inlined_call_operand.hbm [shape: f32[16,256], index: 0, kind: input, shape index: {}]
  %s1 = inlined_call_operand.vmem [shape: s32[1,256], index: 1, kind: input, shape index: {}]
  %s2 = inlined_call_operand.vmem [shape: f32[16,1], index: 2, kind: input, shape index: {}]
  %s3 = inlined_call_operand.hbm [shape: f32[1,256], index: 3, kind: output, shape index: {}]
  %s4 = sld [smem:[#allocation0]]
  $region49: #{tpu_custom_call.1} parent=0
    _
  %s6 = ssub.s32 1, %s4
  %s7 = scalar_select 0, %s6, %s4
  $region1: #{tpu_custom_call.1} parent=0
    #allocation2 [shape = 'u8[16384]{0}', space=vmem, size = 0x4000, scoped, tag = 'input window, operand 0']
    #allocation3 [shape = 's32[2]{0}', space=sflag, size = 0x8, scoped, tag = 'scoped memory for tpu_custom_call.1']
    #allocation4 [shape = 's32[2]{0}', space=sflag, size = 0x8, scoped, tag = 'scoped memory for tpu_custom_call.1']
    #allocation5 [shape = 'u8[1024]{0}', space=vmem, size = 0x400, scoped, tag = 'output window, operand 0']
    %8 = vsyncpa [#allocation3], 0
    %s9 = scalar_lea.sflag [#allocation3], 1
    %10 = vsyncpa %s9, 0
    %11 = vsyncpa [#allocation4], 0
    %s12 = scalar_lea.sflag [#allocation4], 1
    %13 = vsyncpa %s12, 0
    loop: start=0, step=1, limit=4
    $region2: #{tpu_custom_call.1} parent=1 // loop_pre_header
      _
    $region3: #{tpu_custom_call.1} parent=1 // loop_header
      %s15 = sphi 0, %s19
      %p16 = scmp.ge.s32.totalorder %s15, 4
      %s25 = sphi 0, %s27
      %s28 = sphi 0, %s25
      %s29 = sphi 0, %s28
      %s45 = sphi 0, %s29
      %s51 = sphi 0, %s53
      %s54 = sphi 0, %s51
      %s55 = sphi 0, %s54
      %s71 = sphi 0, %s55
      %s75 = sphi 0, %s75
      %s77 = sphi 0, %s75
      %s78 = sphi 0, %s77
      %s92 = sphi 0, %s78
      %s98 = sphi 0, %s100
      %s101 = sphi 0, %s98
      %s102 = sphi 0, %s101
      %s118 = sphi 0, %s102
    $region4: #{tpu_custom_call.1} parent=1 // loop_header_branch
      %18 = sbr.rel (%p16) target = $region8
    $region5: #{tpu_custom_call.1} parent=1 // loop_body
      %s20 = ssub.s32 %s15, 1
      %s21 = ssub.s32 %s15, 2
      %s22 = sadd.s32 %s15, 1
      %s23 = ssub.s32 %s15, %s22
      %p24 = scmp.eq.s32.totalorder %s23, 0
      %s26 = sadd.s32 %s25, 1
      %s27 = scalar_select %p24, %s25, %s26
      %p30 = pneg %p24
      %p31 = scmp.eq.s32.totalorder %s15, 1
      %p32 = por %p30, %p31
      %p33 = scmp.ne.s32.totalorder %s25, %s28
      %p34 = scmp.eq.s32.totalorder %s15, 0
      %p35 = por %p33, %p34
      %p36 = scmp.ne.s32.totalorder %s25, %s28
      %p37 = scmp.eq.s32.totalorder %s20, 1
      %p38 = por %p36, %p37
      %p39 = scmp.ne.s32.totalorder %s28, %s29
      %p40 = scmp.eq.s32.totalorder %s20, 0
      %p41 = por %p39, %p40
      %p42 = scmp.ne.s32.totalorder %s28, %s29
      %p43 = scmp.eq.s32.totalorder %s21, 1
      %p44 = por %p42, %p43
      %p46 = scmp.ne.s32.totalorder %s29, %s45
      %p47 = scmp.eq.s32.totalorder %s21, 0
      %p48 = por %p46, %p47
      %s49 = ssub.s32 %s15, %s22
      %p50 = scmp.eq.s32.totalorder %s49, 0
      %s52 = sadd.s32 %s51, 1
      %s53 = scalar_select %p50, %s51, %s52
      %p56 = pneg %p50
      %p57 = scmp.eq.s32.totalorder %s15, 1
      %p58 = por %p56, %p57
      %p59 = scmp.ne.s32.totalorder %s51, %s54
      %p60 = scmp.eq.s32.totalorder %s15, 0
      %p61 = por %p59, %p60
      %p62 = scmp.ne.s32.totalorder %s51, %s54
      %p63 = scmp.eq.s32.totalorder %s20, 1
      %p64 = por %p62, %p63
      %p65 = scmp.ne.s32.totalorder %s54, %s55
      %p66 = scmp.eq.s32.totalorder %s20, 0
      %p67 = por %p65, %p66
      %p68 = scmp.ne.s32.totalorder %s54, %s55
      %p69 = scmp.eq.s32.totalorder %s21, 1
      %p70 = por %p68, %p69
      %p72 = scmp.ne.s32.totalorder %s55, %s71
      %p73 = scmp.eq.s32.totalorder %s21, 0
      %p74 = por %p72, %p73
      %s76 = sadd.s32 %s75, 1
      %p79 = scmp.eq.s32.totalorder %s15, 1
      %p80 = scmp.ne.s32.totalorder %s75, %s77
      %p81 = scmp.eq.s32.totalorder %s15, 0
      %p82 = por %p80, %p81
      %p83 = scmp.ne.s32.totalorder %s75, %s77
      %p84 = scmp.eq.s32.totalorder %s20, 1
      %p85 = por %p83, %p84
      %p86 = scmp.ne.s32.totalorder %s77, %s78
      %p87 = scmp.eq.s32.totalorder %s20, 0
      %p88 = por %p86, %p87
      %p89 = scmp.ne.s32.totalorder %s77, %s78
      %p90 = scmp.eq.s32.totalorder %s21, 1
      %p91 = por %p89, %p90
      %p93 = scmp.ne.s32.totalorder %s78, %s92
      %p94 = scmp.eq.s32.totalorder %s21, 0
      %p95 = por %p93, %p94
      %s96 = ssub.s32 %s15, %s22
      %p97 = scmp.eq.s32.totalorder %s96, 0
      %s99 = sadd.s32 %s98, 1
      %s100 = scalar_select %p97, %s98, %s99
      %p103 = pneg %p97
      %p104 = scmp.eq.s32.totalorder %s15, 1
      %p105 = por %p103, %p104
      %p106 = scmp.ne.s32.totalorder %s98, %s101
      %p107 = scmp.eq.s32.totalorder %s15, 0
      %p108 = por %p106, %p107
      %p109 = scmp.ne.s32.totalorder %s98, %s101
      %p110 = scmp.eq.s32.totalorder %s20, 1
      %p111 = por %p109, %p110
      %p112 = scmp.ne.s32.totalorder %s101, %s102
      %p113 = scmp.eq.s32.totalorder %s20, 0
      %p114 = por %p112, %p113
      %p115 = scmp.ne.s32.totalorder %s101, %s102
      %p116 = scmp.eq.s32.totalorder %s21, 1
      %p117 = por %p115, %p116
      %p119 = scmp.ne.s32.totalorder %s102, %s118
      %p120 = scmp.eq.s32.totalorder %s21, 0
      %p121 = por %p119, %p120
      %p122 = scmp.le.s32.totalorder 1, %s15
      %p123 = scmp.lt.s32.totalorder %s15, 3
      %p124 = pnand %p122, %p123
      %p125 = pneg %p124
      // Predicated region
      $region9: #{tpu_custom_call.1} parent=5 // pred_check
        _
      $region10: #{tpu_custom_call.1} parent=5 // pred_check_branch
        %127 = sbr.rel (%p124) target = $region12
      $region11: #{tpu_custom_call.1} parent=5 // pred_region
        %s128 = ssub.s32 %s15, 1
        // Predicated region
        $region13: #{tpu_custom_call.1} parent=11 // pred_check
          %p129 = pneg %p88
        $region14: #{tpu_custom_call.1} parent=11 // pred_check_branch
          %131 = sbr.rel (%p129) target = $region16
        $region15: #{tpu_custom_call.1} parent=11 // pred_region
          _
        $region16: #{tpu_custom_call.1} parent=11 // pred_fallthru
          _
      $region12: #{tpu_custom_call.1} parent=5 // pred_fallthru
        _
      %p132 = scmp.lt.s32.totalorder %s15, 2
      // Predicated region
      $region17: #{tpu_custom_call.1} parent=5 // pred_check
        %p133 = pneg %p132
      $region18: #{tpu_custom_call.1} parent=5 // pred_check_branch
        %135 = sbr.rel (%p133) target = $region20
      $region19: #{tpu_custom_call.1} parent=5 // pred_region
        // Predicated region
        $region21: #{tpu_custom_call.1} parent=19 // pred_check
          %p136 = pneg %p35
        $region22: #{tpu_custom_call.1} parent=19 // pred_check_branch
          %138 = sbr.rel (%p136) target = $region24
        $region23: #{tpu_custom_call.1} parent=19 // pred_region
          %s139 = sand.u32 %s25, 1
          %s140 = scalar_lea.sflag [#allocation3], %s139
          %s141 = sand.u32 %s25, 1
          %s142 = smul.addr %s141, 16
          %s143 = scalar_lea.vmem [#allocation2], %s142
          %s145 = ssub.s32 256, 256
          %146 = vsyncadd %s140, %s145
          %s147 = smul.addr %s15, 128
          %s148 = scalar_lea.hbm %s0, %s147
          %s149 = sshll.u32 %s143, 4
          %s150 = int_to_ptr.vmem [resolvable:$true] %s149
          %155 = dma.hbm_to_vmem [thread:$0]  %s148, 256, %s150, %s140, 256, 128, 8
        $region24: #{tpu_custom_call.1} parent=19 // pred_fallthru
          _
        // Predicated region
        $region25: #{tpu_custom_call.1} parent=19 // pred_check
          %p156 = pneg %p61
        $region26: #{tpu_custom_call.1} parent=19 // pred_check_branch
          %158 = sbr.rel (%p156) target = $region28
        $region27: #{tpu_custom_call.1} parent=19 // pred_region
          %p159 = scmp.lt.s32.totalorder %s15, 1
          %s160 = scalar_select %p159, %s15, 1
          %s161 = scalar_lea.vmem %s1, %s160
        $region28: #{tpu_custom_call.1} parent=19 // pred_fallthru
          _
      $region20: #{tpu_custom_call.1} parent=5 // pred_fallthru
        _
      %p162 = scmp.le.s32.totalorder 1, %s15
      %p163 = scmp.lt.s32.totalorder %s15, 3
      %p164 = pnand %p162, %p163
      %p165 = pneg %p164
      // Predicated region
      $region29: #{tpu_custom_call.1} parent=5 // pred_check
        _
      $region30: #{tpu_custom_call.1} parent=5 // pred_check_branch
        %167 = sbr.rel (%p164) target = $region32
      $region31: #{tpu_custom_call.1} parent=5 // pred_region
        %s168 = ssub.s32 %s15, 1
        %s169 = sand.u32 %s28, 1
        %s170 = scalar_lea.sflag [#allocation3], %s169
        %s171 = sand.u32 %s28, 1
        %s172 = smul.addr %s171, 16
        %s173 = scalar_lea.vmem [#allocation2], %s172
        // Predicated region
        $region33: #{tpu_custom_call.1} parent=31 // pred_check
          %p174 = pneg %p41
        $region34: #{tpu_custom_call.1} parent=31 // pred_check_branch
          %176 = sbr.rel (%p174) target = $region36
        $region35: #{tpu_custom_call.1} parent=31 // pred_region
          %177 = dma.done %s170, 256
        $region36: #{tpu_custom_call.1} parent=31 // pred_fallthru
          _
        %s178 = sand.u32 %s28, 1
        %s179 = scalar_lea.sflag [#allocation3], %s178
        %s180 = sand.u32 %s28, 1
        %s181 = smul.addr %s180, 16
        %s182 = scalar_lea.vmem [#allocation2], %s181
        %p183 = pneg %p41
        %p184 = pneg %p38
        %p185 = scmp.lt.s32.totalorder %s20, 1
        %s186 = scalar_select %p185, %s20, 1
        %s187 = scalar_lea.vmem %s1, %s186
        %p188 = pneg %p67
        %p189 = pneg %p64
        %p190 = pneg %p88
        %p191 = pneg %p85
        %p192 = pneg %p114
        %p193 = pneg %p111
        %s194 = sand.u32 %s101, 1
        %s195 = scalar_lea.sflag [#allocation4], %s194
        %s196 = sand.u32 %s101, 1
        %s197 = scalar_lea.vmem [#allocation5], %s196
        %p198 = scmp.lt.s32.totalorder %s20, 1
        %s199 = scalar_select %p198, %s20, 1
        %s200 = scalar_lea.vmem %s1, %s199
        %v201 = vld [vmem:[%s173] sm:$0xff]
        %v202 = vld [vmem:[%s173 + $0x8] sm:$0xff]
        %v203 = vld [vmem:[%s200] sm:$0x1]
        %v204 = vld [vmem:[%s2] sm:$0xff]
        %v205 = vld [vmem:[%s2 + $0x8] sm:$0xff]
        %v206 = vmax.f32 %v201, %v202
        %v207 = vrot.slane %v206, 4
        %v208 = vmax.f32 %v206, %v207
        %v209 = vrot.slane %v208, 2
        %v210 = vmax.f32 %v208, %v209
        %v211 = vrot.slane %v210, 1
        %v212 = vmax.f32 %v210, %v211
        %v213 = vsub.f32 %v201, %v212
        %v214 = vsub.f32 %v202, %v212
        %v215 = vmul.f32 %v213, 1.442695
        %v216 = vpow.pop %v215
        %v217 = vmul.f32 %v214, 1.442695
        %v218 = vpow.pop %v217
        %v219 = vadd.f32 %v216, %v218
        %v220 = vrot.slane %v219, 4
        %v221 = vadd.f32 %v219, %v220
        %v222 = vrot.slane %v221, 2
        %v223 = vadd.f32 %v221, %v222
        %v224 = vrot.slane %v223, 1
        %v225 = vadd.f32 %v223, %v224
        %v226 = vlaneseq
        %v227 = vshrl.u32 %v226, 7
        %v228 = vadd.s32 %v227, 8
        %v229 = vlaneseq
        %v230 = vshrl.u32 %v229, 7
        %v231 = vsub.s32 0, %v230
        %v232 = vrot.slane %v203, %v231
        %vm233 = vcmp.eq.s32.totalorder %v227, %v232
        %vm234 = vcmp.eq.s32.totalorder %v228, %v232
        %v235 = vsel %vm233, 1, 0
        %v236 = vsel %vm234, 1, 0
        %v237 = vcvt.s32.f32 %v235
        %v238 = vcvt.s32.f32 %v236
        %v239 = vmul.f32 %v201, %v237
        %v240 = vmul.f32 %v202, %v238
        %v241 = vadd.f32 %v239, %v240
        %v242 = vrot.slane %v241, 4
        %v243 = vadd.f32 %v241, %v242
        %v244 = vrot.slane %v243, 2
        %v245 = vadd.f32 %v243, %v244
        %v246 = vrot.slane %v245, 1
        %v247 = vadd.f32 %v245, %v246
        %249 = vset.pattern.permute.xlu0 0
        %250 = vperm.xlu0 %249, %v204
        %v251 = vpop.permute.xlu0 %250
        %254 = vset.pattern.permute.xlu0 0
        %255 = vperm.xlu0 %254, %v205
        %v256 = vpop.permute.xlu0 %255
        %v258 = vmul.f32 %v251, %v237
        %v259 = vmul.f32 %v256, %v238
        %v260 = vadd.f32 %v258, %v259
        %v261 = vrot.slane %v260, 4
        %v262 = vadd.f32 %v260, %v261
        %v263 = vrot.slane %v262, 2
        %v264 = vadd.f32 %v262, %v263
        %v265 = vrot.slane %v264, 1
        %v266 = vadd.f32 %v264, %v265
        %v267 = vsub.f32 %v247, %v212
        %v268 = vlog2.pop %v225
        %v269 = vmul.f32 %v268, 0.6931472
        %v270 = vsub.f32 %v267, %v269
        %v271 = vmul.f32 %v270, 1.442695
        %v272 = vpow.pop %v271
        %v273 = vsub.f32 1.0, %v272
        %v274 = vmax.f32 %v273, 0.0
        %v275 = vsub.f32 0.0, %v266
        %v276 = vmul.f32 %v274, %v274
        %v277 = vmul.f32 %v275, %v276
        %v278 = vmul.f32 %v277, %v270
        %279 = vst [vmem:[%s197] sm:$0x1] %v278
        %s280 = sand.u32 %s101, 1
        %s281 = scalar_lea.sflag [#allocation4], %s280
        %s282 = sand.u32 %s101, 1
        %s283 = scalar_lea.vmem [#allocation5], %s282
        // Predicated region
        $region37: #{tpu_custom_call.1} parent=31 // pred_check
          %p284 = pneg %p111
        $region38: #{tpu_custom_call.1} parent=31 // pred_check_branch
          %286 = sbr.rel (%p284) target = $region40
        $region39: #{tpu_custom_call.1} parent=31 // pred_region
          %s288 = ssub.s32 16, 16
          %289 = vsyncadd %s281, %s288
          %s290 = smul.addr %s20, 16
          %s291 = scalar_lea.hbm %s3, %s290
          %s293 = sshll.u32 %s283, 4
          %s294 = int_to_ptr.vmem [resolvable:$true] %s293
          %296 = dma.vmem_to_hbm [thread:$0]  %s294, 16, %s291, %s281
        $region40: #{tpu_custom_call.1} parent=31 // pred_fallthru
          _
      $region32: #{tpu_custom_call.1} parent=5 // pred_fallthru
        _
      %p297 = scmp.le.s32.totalorder 2, %s15
      // Predicated region
      $region41: #{tpu_custom_call.1} parent=5 // pred_check
        %p298 = pneg %p297
      $region42: #{tpu_custom_call.1} parent=5 // pred_check_branch
        %300 = sbr.rel (%p298) target = $region44
      $region43: #{tpu_custom_call.1} parent=5 // pred_region
        %s301 = ssub.s32 %s15, 2
        // Predicated region
        $region45: #{tpu_custom_call.1} parent=43 // pred_check
          %p302 = pneg %p117
        $region46: #{tpu_custom_call.1} parent=43 // pred_check_branch
          %304 = sbr.rel (%p302) target = $region48
        $region47: #{tpu_custom_call.1} parent=43 // pred_region
          %s305 = sand.u32 %s102, 1
          %s306 = scalar_lea.sflag [#allocation4], %s305
          %s307 = sand.u32 %s102, 1
          %s308 = scalar_lea.vmem [#allocation5], %s307
          %309 = dma.done %s306, 16
        $region48: #{tpu_custom_call.1} parent=43 // pred_fallthru
          _
      $region44: #{tpu_custom_call.1} parent=5 // pred_fallthru
        _
    $region6: #{tpu_custom_call.1} parent=1 // loop_footer
      %s19 = sadd.s32 1, %s15
    $region7: #{tpu_custom_call.1} parent=1 // loop_footer_branch
      %14 = sbr.rel target = $region3
    $region8: #{tpu_custom_call.1} parent=1 // loop_exit
      _
    %310 = vsyncpa [#allocation3], 1
    %s311 = scalar_lea.sflag [#allocation3], 1
    %312 = vsyncpa %s311, 1
    %313 = vsyncpa [#allocation4], 1
    %s314 = scalar_lea.sflag [#allocation4], 1
    %315 = vsyncpa %s314, 1

</llo_original>
